<compile_context>
chip_gen: v7x
topology: tpu7x:2x2x1
jax: 0.10.0
libtpu: 0.0.40
codegen_flags: <defaults>
</compile_context>

<pallas_src>
import functools
import math

import jax
import jax.numpy as jnp
from jax import lax
from jax.experimental import pallas as pl
from jax.experimental.pallas import tpu as pltpu


def _label_smoothing_kernel(x_ref, tgt_ref, out_ref, *,
                            padding_idx, confidence, smooth_val, row_entropy,
                            row_tile, num_rows):
    x = x_ref[...].astype(jnp.float32)          # (TN, V) log-probs
    tgt = tgt_ref[...]                          # (TN, 1) int32
    tn, v = x.shape

    # x[row, tgt[row]] via masked lane-reduce (no gather needed).
    # TODO(synk): for bf16 inputs on v6e/v7x this iota+cmp chain is the VALU hot spot; a VMEM
    #             cached iota was considered but is unsafe to init under pl.when(pid==0) with a
    #             megacore-split "parallel" grid, so it is regenerated per step.
    col = lax.broadcasted_iota(jnp.int32, (tn, v), 1)
    x_at_tgt = jnp.sum(jnp.where(col == tgt, x, 0.0), axis=-1, keepdims=True)   # (TN, 1)
    row_sum = jnp.sum(x, axis=-1, keepdims=True)                                # (TN, 1)
    x_at_pad = x[:, padding_idx:padding_idx + 1]                                # static lane slice

    # sum(t * x) for a non-padding row, collapsed algebraically.
    cross = (confidence - smooth_val) * x_at_tgt + smooth_val * (row_sum - x_at_pad)

    # Row validity: inside the (unpadded) input AND target is not the padding index.
    row0 = pl.program_id(0) * row_tile
    rows = row0 + lax.broadcasted_iota(jnp.int32, (tn, 1), 0)
    valid = (rows < num_rows) & (tgt != padding_idx)

    # KL per row = sum(t*log t) - sum(t*x); select (not multiply) so invalid rows are exactly 0.
    row_loss = jnp.where(valid, row_entropy - cross, 0.0)                        # (TN, 1)

    # Per-block partial sum, placed at [0, 0] of a lane-dense (8, 128) tile -> unmasked full
    # vreg store instead of a lane-width-1 masked store.
    partial = jnp.sum(row_loss, axis=0, keepdims=True)                           # (1, 1)
    r8 = lax.broadcasted_iota(jnp.int32, (8, 128), 0)
    c128 = lax.broadcasted_iota(jnp.int32, (8, 128), 1)
    out_ref[...] = jnp.where((r8 == 0) & (c128 == 0), partial, 0.0)


def _vmem_capacity_bytes():
    try:
        return int(pltpu.get_tpu_info().vmem_capacity_bytes)
    except Exception:
        return 64 * 1024 * 1024   # conservative (v7x-sized) fallback


def _choose_row_tile(n, v, itemsize, x_buffer_budget_bytes):
    """Largest row tile whose double-buffered x block fits the byte budget.

    Aligned to the dtype's native sublane packing (8 rows for 4-byte, 16 for 2-byte,
    32 for 1-byte) and capped so the grid has >= 2 blocks when possible (keeps both
    v7x TensorCores busy and double-buffering actually overlaps).
    """
    align = max(8, 32 // max(1, itemsize))
    max_rows = x_buffer_budget_bytes // (2 * v * itemsize)
    tile = max(align, (max_rows // align) * align)

    n_up = ((n + align - 1) // align) * align
    if n_up > align:
        half = max(align, (n_up // 2 // align) * align)
        tile = min(tile, half)
    else:
        tile = align
    return int(tile)


def label_smoothing_loss(x, target, padding_idx, smoothing, vocab_size=None, row_tile=None):
    """x: [bsz, seq_len, vocab] log-probs (f32 or bf16); target: [bsz, seq_len] int."""
    if vocab_size is None:
        vocab_size = x.shape[-1]
    assert x.shape[-1] == vocab_size, f"last dim {x.shape[-1]} != vocab_size {vocab_size}"
    assert vocab_size > 2, "smoothing/(vocab_size-2) requires vocab_size > 2"

    v = int(x.shape[-1])
    n = 1
    for d in x.shape[:-1]:
        n *= int(d)
    x2 = x.reshape(n, v)
    tgt2 = target.reshape(n, 1).astype(jnp.int32)

    confidence = 1.0 - smoothing
    smooth_val = smoothing / (vocab_size - 2)

    def _xlogy(a):
        return a * math.log(a) if a > 0.0 else 0.0

    # Entropy of true_dist for a non-padding row (constant across rows).
    row_entropy = _xlogy(confidence) + (vocab_size - 2) * _xlogy(smooth_val)

    # Generation-aware VMEM sizing: ~3/4 of physical VMEM as the scoped limit, ~40% of that
    # for the double-buffered x blocks (48 MiB / ~19 MiB on v7x, 96 MiB / ~38 MiB on v5e/v6e).
    itemsize = int(jnp.dtype(x2.dtype).itemsize)
    vmem_limit = int((_vmem_capacity_bytes() * 3) // 4)
    x_budget = (vmem_limit * 2) // 5

    if row_tile is None:
        row_tile = _choose_row_tile(n, v, itemsize, x_budget)
    row_tile = int(row_tile)
    num_blocks = (n + row_tile - 1) // row_tile

    kernel = functools.partial(
        _label_smoothing_kernel,
        padding_idx=int(padding_idx),
        confidence=float(confidence),
        smooth_val=float(smooth_val),
        row_entropy=float(row_entropy),
        row_tile=row_tile,
        num_rows=int(n),
    )

    partials = pl.pallas_call(
        kernel,
        out_shape=jax.ShapeDtypeStruct((num_blocks * 8, 128), jnp.float32),
        grid_spec=pltpu.PrefetchScalarGridSpec(
            num_scalar_prefetch=0,
            grid=(num_blocks,),
            in_specs=[
                pl.BlockSpec((row_tile, v), lambda i: (i, 0)),   # ragged last block OK; masked in-kernel
                pl.BlockSpec((row_tile, 1), lambda i: (i, 0)),
            ],
            out_specs=pl.BlockSpec((8, 128), lambda i: (i, 0)),
        ),
        compiler_params=pltpu.CompilerParams(
            dimension_semantics=("parallel",),
            vmem_limit_bytes=vmem_limit),
    )(x2, tgt2)

    # reduction='batchmean': divide by the number of rows N.
    return jnp.sum(partials) / jnp.float32(n)


def _reference_loss(x, target, padding_idx, smoothing, vocab_size):
    """Plain-JAX reference mirroring the PyTorch module."""
    confidence = 1.0 - smoothing
    n = x.shape[0] * x.shape[1]
    x2 = x.reshape(n, vocab_size).astype(jnp.float32)
    t2 = target.reshape(n)
    smooth_val = smoothing / (vocab_size - 2)
    true_dist = jnp.full_like(x2, smooth_val)
    true_dist = true_dist.at[jnp.arange(n), t2].set(confidence)
    true_dist = true_dist.at[:, padding_idx].set(0.0)
    true_dist = jnp.where((t2 == padding_idx)[:, None], 0.0, true_dist)
    term = jnp.where(true_dist > 0,
                     true_dist * jnp.log(jnp.where(true_dist > 0, true_dist, 1.0)),
                     0.0) - true_dist * x2
    return jnp.sum(term) / n


if __name__ == "__main__":
    padding_idx = 0
    smoothing = 0.1

    key = jax.random.PRNGKey(0)
    k1, k2, k3, k4 = jax.random.split(key, 4)

    # Test 1: f32, row count a multiple of the tile.
    bsz, seq_len, vocab = 2, 8, 32
    logits = jax.random.normal(k1, (bsz, seq_len, vocab), dtype=jnp.float32)
    x = jax.nn.log_softmax(logits, axis=-1)            # KLDivLoss expects log-probs
    target = jax.random.randint(k2, (bsz, seq_len), 0, vocab, dtype=jnp.int32)
    target = target.at[0, 3].set(padding_idx)          # ensure some padding rows
    target = target.at[1, 5].set(padding_idx)
    loss = jax.block_until_ready(label_smoothing_loss(x, target, padding_idx, smoothing, vocab))
    ref = _reference_loss(x, target, padding_idx, smoothing, vocab)
    assert jnp.allclose(loss, ref, rtol=1e-5, atol=1e-5), (loss, ref)

    # Test 2: f32, ragged last block (N = 21 is not a multiple of the 8-row tile).
    bsz, seq_len, vocab = 3, 7, 32
    logits2 = jax.random.normal(k3, (bsz, seq_len, vocab), dtype=jnp.float32)
    x2 = jax.nn.log_softmax(logits2, axis=-1)
    target2 = jax.random.randint(k4, (bsz, seq_len), 0, vocab, dtype=jnp.int32)
    target2 = target2.at[1, 2].set(padding_idx)
    loss2 = jax.block_until_ready(label_smoothing_loss(x2, target2, padding_idx, smoothing, vocab))
    ref2 = _reference_loss(x2, target2, padding_idx, smoothing, vocab)
    assert jnp.allclose(loss2, ref2, rtol=1e-5, atol=1e-5), (loss2, ref2)

    # Test 3: bf16 input, ragged, exercises the 16-row bf16 tile alignment path.
    x2_bf16 = x2.astype(jnp.bfloat16)
    loss3 = jax.block_until_ready(
        label_smoothing_loss(x2_bf16, target2, padding_idx, smoothing, vocab))
    ref3 = _reference_loss(x2_bf16.astype(jnp.float32), target2, padding_idx, smoothing, vocab)
    assert jnp.allclose(loss3, ref3, rtol=2e-3, atol=2e-3), (loss3, ref3)

    print("KERNEL_OK")
</pallas_src>

<mosaic_0001>
module attributes {stable_mosaic.version = 11 : i64} {
  func.func @_label_smoothing_kernel(%arg0: i32, %arg1: memref<8x32xf32, #tpu.memory_space<vmem>>, %arg2: memref<8x1xi32, #tpu.memory_space<vmem>>, %arg3: memref<8x128xf32, #tpu.memory_space<vmem>>) attributes {dimension_semantics = [#tpu.dimension_semantics<parallel>], iteration_bounds = array<i64: 2>, scalar_prefetch = 0 : i64, scratch_operands = 0 : i64, tpu.core_type = #tpu.core_type<tc>, window_params = [{transform_indices = @transform_0, window_bounds = array<i64: 8, 32>}, {transform_indices = @transform_1, window_bounds = array<i64: 8, 1>}, {transform_indices = @transform_2, window_bounds = array<i64: 8, 128>}]} {
    %c0 = arith.constant 0 : index
    %c0_0 = arith.constant 0 : index
    %0 = vector.load %arg1[%c0, %c0_0] : memref<8x32xf32, #tpu.memory_space<vmem>>, vector<8x32xf32>
    %c0_1 = arith.constant 0 : index
    %c0_2 = arith.constant 0 : index
    %1 = vector.load %arg2[%c0_1, %c0_2] : memref<8x1xi32, #tpu.memory_space<vmem>>, vector<8x1xi32>
    %2 = tpu.iota {dimensions = array<i32: 1>} : vector<8x32xi32>
    %3 = vector.broadcast %1 : vector<8x1xi32> to vector<8x32xi32>
    %4 = arith.cmpi eq, %2, %3 : vector<8x32xi32>
    %cst = arith.constant 0.000000e+00 : f32
    %5 = vector.broadcast %cst : f32 to vector<8x32xf32>
    %6 = arith.select %4, %0, %5 : vector<8x32xi1>, vector<8x32xf32>
    %cst_3 = arith.constant dense<0.000000e+00> : vector<8xf32>
    %7 = vector.multi_reduction <add>, %6, %cst_3 [1] : vector<8x32xf32> to vector<8xf32>
    %8 = vector.shape_cast %7 : vector<8xf32> to vector<8x1xf32>
    %cst_4 = arith.constant dense<0.000000e+00> : vector<8xf32>
    %9 = vector.multi_reduction <add>, %0, %cst_4 [1] : vector<8x32xf32> to vector<8xf32>
    %10 = vector.shape_cast %9 : vector<8xf32> to vector<8x1xf32>
    %11 = vector.extract_strided_slice %0 {offsets = [0, 0], sizes = [8, 1], strides = [1, 1]} : vector<8x32xf32> to vector<8x1xf32>
    %cst_5 = arith.constant 0.896666646 : f32
    %12 = vector.broadcast %cst_5 : f32 to vector<8x1xf32>
    %13 = arith.mulf %12, %8 : vector<8x1xf32>
    %14 = arith.subf %10, %11 : vector<8x1xf32>
    %cst_6 = arith.constant 0.00333333341 : f32
    %15 = vector.broadcast %cst_6 : f32 to vector<8x1xf32>
    %16 = arith.mulf %15, %14 : vector<8x1xf32>
    %17 = arith.addf %13, %16 : vector<8x1xf32>
    %c8_i32 = arith.constant 8 : i32
    %18 = arith.muli %arg0, %c8_i32 : i32
    %19 = tpu.iota {dimensions = array<i32: 0>} : vector<8x1xi32>
    %20 = vector.broadcast %18 : i32 to vector<8x1xi32>
    %21 = arith.addi %20, %19 : vector<8x1xi32>
    %c16_i32 = arith.constant 16 : i32
    %22 = vector.broadcast %c16_i32 : i32 to vector<8x1xi32>
    %23 = arith.cmpi slt, %21, %22 : vector<8x1xi32>
    %c0_i32 = arith.constant 0 : i32
    %24 = vector.broadcast %c0_i32 : i32 to vector<8x1xi32>
    %25 = arith.cmpi ne, %1, %24 : vector<8x1xi32>
    %26 = arith.andi %23, %25 : vector<8x1xi1>
    %cst_7 = arith.constant -0.665202737 : f32
    %27 = vector.broadcast %cst_7 : f32 to vector<8x1xf32>
    %28 = arith.subf %27, %17 : vector<8x1xf32>
    %cst_8 = arith.constant 0.000000e+00 : f32
    %29 = vector.broadcast %cst_8 : f32 to vector<8x1xf32>
    %30 = arith.select %26, %28, %29 : vector<8x1xi1>, vector<8x1xf32>
    %cst_9 = arith.constant dense<0.000000e+00> : vector<1xf32>
    %31 = vector.multi_reduction <add>, %30, %cst_9 [0] : vector<8x1xf32> to vector<1xf32>
    %32 = vector.shape_cast %31 : vector<1xf32> to vector<1x1xf32>
    %33 = tpu.iota {dimensions = array<i32: 0>} : vector<8x128xi32>
    %34 = tpu.iota {dimensions = array<i32: 1>} : vector<8x128xi32>
    %c0_i32_10 = arith.constant 0 : i32
    %35 = vector.broadcast %c0_i32_10 : i32 to vector<8x128xi32>
    %36 = arith.cmpi eq, %33, %35 : vector<8x128xi32>
    %c0_i32_11 = arith.constant 0 : i32
    %37 = vector.broadcast %c0_i32_11 : i32 to vector<8x128xi32>
    %38 = arith.cmpi eq, %34, %37 : vector<8x128xi32>
    %39 = arith.andi %36, %38 : vector<8x128xi1>
    %cst_12 = arith.constant 0.000000e+00 : f32
    %40 = vector.shape_cast %32 : vector<1x1xf32> to vector<1x1xf32>
    %41 = vector.broadcast %40 : vector<1x1xf32> to vector<8x128xf32>
    %42 = vector.broadcast %cst_12 : f32 to vector<8x128xf32>
    %43 = arith.select %39, %41, %42 : vector<8x128xi1>, vector<8x128xf32>
    %c0_13 = arith.constant 0 : index
    %c0_14 = arith.constant 0 : index
    %44 = vector.load %arg3[%c0_13, %c0_14] : memref<8x128xf32, #tpu.memory_space<vmem>>, vector<8x128xf32>
    tpu.vector_store %arg3[%c0_13, %c0_14], %43 {strides = array<i32>} : memref<8x128xf32, #tpu.memory_space<vmem>>, vector<8x128xf32>,
    return
  }
  func.func @transform_0(%arg0: i32) -> (i32, i32) {
    %c0_i32 = arith.constant 0 : i32
    %c0_i32_0 = arith.constant 0 : i32
    return %arg0, %c0_i32 : i32, i32
  }
  func.func @transform_1(%arg0: i32) -> (i32, i32) {
    %c0_i32 = arith.constant 0 : i32
    %c0_i32_0 = arith.constant 0 : i32
    return %arg0, %c0_i32 : i32, i32
  }
  func.func @transform_2(%arg0: i32) -> (i32, i32) {
    %c0_i32 = arith.constant 0 : i32
    %c0_i32_0 = arith.constant 0 : i32
    return %arg0, %c0_i32 : i32, i32
  }
}

</mosaic_0001>

<llo_original>
// kernel: tpu_custom_call.1
$region0: #{tpu_custom_call.1}
  #allocation0 [shape = 'u32[]', space=smem, size = 0x4, offset = 0x4, fixed_abs, tag = 'smem constant byte address 0x4 - core index']
  #allocation1 [shape = 'u32[144,128]{1,0:T(1,128)}', space=vmem, size = 0x12000, scoped, tag = 'internal scratch']
  %s0 = inlined_call_operand.vmem [shape: f32[16,32], index: 0, kind: input, shape index: {}]
  %s1 = inlined_call_operand.vmem [shape: s32[16,1], index: 1, kind: input, shape index: {}]
  %s2 = inlined_call_operand.hbm [shape: f32[16,128], index: 2, kind: output, shape index: {}]
  %s3 = sld [smem:[#allocation0]]
  $region41: #{tpu_custom_call.1} parent=0
    _
  %s5 = ssub.s32 1, %s3
  %s6 = scalar_select 0, %s5, %s3
  $region1: #{tpu_custom_call.1} parent=0
    #allocation2 [shape = 'u8[8192]{0}', space=vmem, size = 0x2000, scoped, tag = 'output window, operand 0']
    #allocation3 [shape = 's32[2]{0}', space=sflag, size = 0x8, scoped, tag = 'scoped memory for tpu_custom_call.1']
    %7 = vsyncpa [#allocation3], 0
    %s8 = scalar_lea.sflag [#allocation3], 1
    %9 = vsyncpa %s8, 0
    loop: start=0, step=1, limit=4
    $region2: #{tpu_custom_call.1} parent=1 // loop_pre_header
      _
    $region3: #{tpu_custom_call.1} parent=1 // loop_header
      %s11 = sphi 0, %s15
      %p12 = scmp.ge.s32.totalorder %s11, 4
      %s21 = sphi 0, %s23
      %s24 = sphi 0, %s21
      %s25 = sphi 0, %s24
      %s41 = sphi 0, %s25
      %s47 = sphi 0, %s49
      %s50 = sphi 0, %s47
      %s51 = sphi 0, %s50
      %s67 = sphi 0, %s51
      %s73 = sphi 0, %s75
      %s76 = sphi 0, %s73
      %s77 = sphi 0, %s76
      %s93 = sphi 0, %s77
    $region4: #{tpu_custom_call.1} parent=1 // loop_header_branch
      %14 = sbr.rel (%p12) target = $region8
    $region5: #{tpu_custom_call.1} parent=1 // loop_body
      %s16 = ssub.s32 %s11, 1
      %s17 = ssub.s32 %s11, 2
      %s18 = sadd.s32 %s11, 1
      %s19 = ssub.s32 %s11, %s18
      %p20 = scmp.eq.s32.totalorder %s19, 0
      %s22 = sadd.s32 %s21, 1
      %s23 = scalar_select %p20, %s21, %s22
      %p26 = pneg %p20
      %p27 = scmp.eq.s32.totalorder %s11, 1
      %p28 = por %p26, %p27
      %p29 = scmp.ne.s32.totalorder %s21, %s24
      %p30 = scmp.eq.s32.totalorder %s11, 0
      %p31 = por %p29, %p30
      %p32 = scmp.ne.s32.totalorder %s21, %s24
      %p33 = scmp.eq.s32.totalorder %s16, 1
      %p34 = por %p32, %p33
      %p35 = scmp.ne.s32.totalorder %s24, %s25
      %p36 = scmp.eq.s32.totalorder %s16, 0
      %p37 = por %p35, %p36
      %p38 = scmp.ne.s32.totalorder %s24, %s25
      %p39 = scmp.eq.s32.totalorder %s17, 1
      %p40 = por %p38, %p39
      %p42 = scmp.ne.s32.totalorder %s25, %s41
      %p43 = scmp.eq.s32.totalorder %s17, 0
      %p44 = por %p42, %p43
      %s45 = ssub.s32 %s11, %s18
      %p46 = scmp.eq.s32.totalorder %s45, 0
      %s48 = sadd.s32 %s47, 1
      %s49 = scalar_select %p46, %s47, %s48
      %p52 = pneg %p46
      %p53 = scmp.eq.s32.totalorder %s11, 1
      %p54 = por %p52, %p53
      %p55 = scmp.ne.s32.totalorder %s47, %s50
      %p56 = scmp.eq.s32.totalorder %s11, 0
      %p57 = por %p55, %p56
      %p58 = scmp.ne.s32.totalorder %s47, %s50
      %p59 = scmp.eq.s32.totalorder %s16, 1
      %p60 = por %p58, %p59
      %p61 = scmp.ne.s32.totalorder %s50, %s51
      %p62 = scmp.eq.s32.totalorder %s16, 0
      %p63 = por %p61, %p62
      %p64 = scmp.ne.s32.totalorder %s50, %s51
      %p65 = scmp.eq.s32.totalorder %s17, 1
      %p66 = por %p64, %p65
      %p68 = scmp.ne.s32.totalorder %s51, %s67
      %p69 = scmp.eq.s32.totalorder %s17, 0
      %p70 = por %p68, %p69
      %s71 = ssub.s32 %s11, %s18
      %p72 = scmp.eq.s32.totalorder %s71, 0
      %s74 = sadd.s32 %s73, 1
      %s75 = scalar_select %p72, %s73, %s74
      %p78 = pneg %p72
      %p79 = scmp.eq.s32.totalorder %s11, 1
      %p80 = por %p78, %p79
      %p81 = scmp.ne.s32.totalorder %s73, %s76
      %p82 = scmp.eq.s32.totalorder %s11, 0
      %p83 = por %p81, %p82
      %p84 = scmp.ne.s32.totalorder %s73, %s76
      %p85 = scmp.eq.s32.totalorder %s16, 1
      %p86 = por %p84, %p85
      %p87 = scmp.ne.s32.totalorder %s76, %s77
      %p88 = scmp.eq.s32.totalorder %s16, 0
      %p89 = por %p87, %p88
      %p90 = scmp.ne.s32.totalorder %s76, %s77
      %p91 = scmp.eq.s32.totalorder %s17, 1
      %p92 = por %p90, %p91
      %p94 = scmp.ne.s32.totalorder %s77, %s93
      %p95 = scmp.eq.s32.totalorder %s17, 0
      %p96 = por %p94, %p95
      %p97 = scmp.le.s32.totalorder 1, %s11
      %p98 = scmp.lt.s32.totalorder %s11, 3
      %p99 = pnand %p97, %p98
      %p100 = pneg %p99
      // Predicated region
      $region9: #{tpu_custom_call.1} parent=5 // pred_check
        _
      $region10: #{tpu_custom_call.1} parent=5 // pred_check_branch
        %102 = sbr.rel (%p99) target = $region12
      $region11: #{tpu_custom_call.1} parent=5 // pred_region
        %s103 = ssub.s32 %s11, 1
      $region12: #{tpu_custom_call.1} parent=5 // pred_fallthru
        _
      %p104 = scmp.lt.s32.totalorder %s11, 2
      // Predicated region
      $region13: #{tpu_custom_call.1} parent=5 // pred_check
        %p105 = pneg %p104
      $region14: #{tpu_custom_call.1} parent=5 // pred_check_branch
        %107 = sbr.rel (%p105) target = $region16
      $region15: #{tpu_custom_call.1} parent=5 // pred_region
        // Predicated region
        $region17: #{tpu_custom_call.1} parent=15 // pred_check
          %p108 = pneg %p31
        $region18: #{tpu_custom_call.1} parent=15 // pred_check_branch
          %110 = sbr.rel (%p108) target = $region20
        $region19: #{tpu_custom_call.1} parent=15 // pred_region
          %p111 = scmp.lt.s32.totalorder %s11, 1
          %s112 = scalar_select %p111, %s11, 1
          %s113 = smul.addr %s112, 8
          %s114 = scalar_lea.vmem %s0, %s113
        $region20: #{tpu_custom_call.1} parent=15 // pred_fallthru
          _
        // Predicated region
        $region21: #{tpu_custom_call.1} parent=15 // pred_check
          %p115 = pneg %p57
        $region22: #{tpu_custom_call.1} parent=15 // pred_check_branch
          %117 = sbr.rel (%p115) target = $region24
        $region23: #{tpu_custom_call.1} parent=15 // pred_region
          %p118 = scmp.lt.s32.totalorder %s11, 1
          %s119 = scalar_select %p118, %s11, 1
          %s120 = smul.addr %s119, 8
          %s121 = scalar_lea.vmem %s1, %s120
        $region24: #{tpu_custom_call.1} parent=15 // pred_fallthru
          _
      $region16: #{tpu_custom_call.1} parent=5 // pred_fallthru
        _
      %p122 = scmp.le.s32.totalorder 1, %s11
      %p123 = scmp.lt.s32.totalorder %s11, 3
      %p124 = pnand %p122, %p123
      %p125 = pneg %p124
      // Predicated region
      $region25: #{tpu_custom_call.1} parent=5 // pred_check
        _
      $region26: #{tpu_custom_call.1} parent=5 // pred_check_branch
        %127 = sbr.rel (%p124) target = $region28
      $region27: #{tpu_custom_call.1} parent=5 // pred_region
        %s128 = ssub.s32 %s11, 1
        %p129 = scmp.lt.s32.totalorder %s16, 1
        %s130 = scalar_select %p129, %s16, 1
        %s131 = smul.addr %s130, 8
        %s132 = scalar_lea.vmem %s0, %s131
        %p133 = pneg %p37
        %p134 = pneg %p34
        %p135 = scmp.lt.s32.totalorder %s16, 1
        %s136 = scalar_select %p135, %s16, 1
        %s137 = smul.addr %s136, 8
        %s138 = scalar_lea.vmem %s1, %s137
        %p139 = pneg %p63
        %p140 = pneg %p60
        %p141 = pneg %p89
        %p142 = pneg %p86
        %s143 = sand.u32 %s76, 1
        %s144 = scalar_lea.sflag [#allocation3], %s143
        %s145 = sand.u32 %s76, 1
        %s146 = smul.addr %s145, 8
        %s147 = scalar_lea.vmem [#allocation2], %s146
        %p148 = scmp.lt.s32.totalorder %s16, 1
        %s149 = scalar_select %p148, %s16, 1
        %s150 = smul.addr %s149, 8
        %s151 = scalar_lea.vmem %s0, %s150
        %p152 = scmp.lt.s32.totalorder %s16, 1
        %s153 = scalar_select %p152, %s16, 1
        %s154 = smul.addr %s153, 8
        %s155 = scalar_lea.vmem %s1, %s154
        %v156 = vld [vmem:[%s151] sm:$0xff]
        %v157 = vld [vmem:[%s155] sm:$0xff]
        %v158 = vlaneseq
        %v159 = vand.u32 %v158, 127
        %160 = vset.pattern.permute.xlu0 0
        %161 = vperm.xlu0 %160, %v157
        %v162 = vpop.permute.xlu0 %161
        %vm163 = vcmp.eq.s32.totalorder %v159, %v162
        %v164 = vsel %vm163, %v156, 0.0
        %vm165 = vcmask 261120
        %v166 = vsel %vm165, %v164, 0.0
        %167 = vadd.xlane.f32.xlu0 %v166
        %v168 = vpop.xlane.xlu0 %167
        %v169 = vsel %vm165, %v156, 0.0
        %170 = vadd.xlane.f32.xlu0 %v169
        %v171 = vpop.xlane.xlu0 %170
        %v172 = vmul.f32 %v168, 0.89666665
        %v173 = vsub.f32 %v171, %v156
        %v174 = vmul.f32 %v173, 0.0033333334
        %v175 = vadd.f32 %v172, %v174
        %s176 = smul.u32 %s16, 8
        %v177 = vlaneseq
        %v178 = vshrl.u32 %v177, 7
        %v179 = vstv %s176
        %v180 = vadd.s32 %v179, %v178
        %vm181 = vcmp.lt.s32.totalorder %v180, 16
        %vm182 = vcmp.ne.s32.totalorder %v157, 0
        %vm183 = vmand %vm181, %vm182
        %v184 = vsub.f32 -0.66520274, %v175
        %v185 = vsel %vm183, %v184, 0.0
        %vm186 = vcmask 7168
        %v187 = vsel %vm186, %v185, 0.0
        %v188 = vrot.slane %v187, 4
        %v189 = vadd.f32 %v187, %v188
        %v190 = vrot.slane %v189, 2
        %v191 = vadd.f32 %v189, %v190
        %v192 = vrot.slane %v191, 1
        %v193 = vadd.f32 %v191, %v192
        %vm194 = vcmp.eq.s32.totalorder %v178, 0
        %vm195 = vcmp.eq.s32.totalorder %v159, 0
        %vm196 = vmand %vm194, %vm195
        %198 = vset.pattern.permute.xlu0 0
        %199 = vperm.xlu0 %198, %v193
        %v200 = vpop.permute.xlu0 %199
        %v202 = vsel %vm196, %v200, 0.0
        %203 = vst [vmem:[%s147] sm:$0xff] %v202
        %s204 = sand.u32 %s76, 1
        %s205 = scalar_lea.sflag [#allocation3], %s204
        %s206 = sand.u32 %s76, 1
        %s207 = smul.addr %s206, 8
        %s208 = scalar_lea.vmem [#allocation2], %s207
        // Predicated region
        $region29: #{tpu_custom_call.1} parent=27 // pred_check
          %p209 = pneg %p86
        $region30: #{tpu_custom_call.1} parent=27 // pred_check_branch
          %211 = sbr.rel (%p209) target = $region32
        $region31: #{tpu_custom_call.1} parent=27 // pred_region
          %s213 = ssub.s32 128, 128
          %214 = vsyncadd %s205, %s213
          %s215 = smul.addr %s16, 128
          %s216 = scalar_lea.hbm %s2, %s215
          %s218 = sshll.u32 %s208, 4
          %s219 = int_to_ptr.vmem [resolvable:$true] %s218
          %221 = dma.vmem_to_hbm [thread:$0]  %s219, 128, %s216, %s205
        $region32: #{tpu_custom_call.1} parent=27 // pred_fallthru
          _
      $region28: #{tpu_custom_call.1} parent=5 // pred_fallthru
        _
      %p222 = scmp.le.s32.totalorder 2, %s11
      // Predicated region
      $region33: #{tpu_custom_call.1} parent=5 // pred_check
        %p223 = pneg %p222
      $region34: #{tpu_custom_call.1} parent=5 // pred_check_branch
        %225 = sbr.rel (%p223) target = $region36
      $region35: #{tpu_custom_call.1} parent=5 // pred_region
        %s226 = ssub.s32 %s11, 2
        // Predicated region
        $region37: #{tpu_custom_call.1} parent=35 // pred_check
          %p227 = pneg %p92
        $region38: #{tpu_custom_call.1} parent=35 // pred_check_branch
          %229 = sbr.rel (%p227) target = $region40
        $region39: #{tpu_custom_call.1} parent=35 // pred_region
          %s230 = sand.u32 %s77, 1
          %s231 = scalar_lea.sflag [#allocation3], %s230
          %s232 = sand.u32 %s77, 1
          %s233 = smul.addr %s232, 8
          %s234 = scalar_lea.vmem [#allocation2], %s233
          %235 = dma.done %s231, 128
        $region40: #{tpu_custom_call.1} parent=35 // pred_fallthru
          _
      $region36: #{tpu_custom_call.1} parent=5 // pred_fallthru
        _
    $region6: #{tpu_custom_call.1} parent=1 // loop_footer
      %s15 = sadd.s32 1, %s11
    $region7: #{tpu_custom_call.1} parent=1 // loop_footer_branch
      %10 = sbr.rel target = $region3
    $region8: #{tpu_custom_call.1} parent=1 // loop_exit
      _
    %236 = vsyncpa [#allocation3], 1
    %s237 = scalar_lea.sflag [#allocation3], 1
    %238 = vsyncpa %s237, 1

</llo_original>
